<compile_context>
chip_gen: v6e
topology: v6e:2x2x1
jax: 0.10.0
libtpu: 0.0.40
codegen_flags: <defaults>
</compile_context>

<pallas_src>
import jax
import jax.numpy as jnp
from jax.experimental import pallas as pl
from jax.experimental.pallas import tpu as pltpu

H = W = 7              # spatial size
CIN = 128              # input channels
COUT = 32              # output channels
KH = KW = 3            # kernel
TAPS = KH * KW         # 9
HP, WP = H + 2, W + 2  # 9, 9  zero-padded spatial grid
NGRID = HP * WP        # 81 flattened padded-grid positions
NBUF = 88              # 81 rows of grid data + 7 zero rows (multiple of 8)
MOUT = 64              # output rows computed per call; row j <-> grid q = j + QOUT0
QOUT0 = 10             # grid index of output row 0 (first valid output pixel)


def conv3x3_kernel(x_ref, w_ref, o_ref):
    """3x3 / stride 1 / pad 1 conv as 9 accumulating MXU dots.

    x_ref: (NBUF, CIN)       f32   flattened zero-padded NHWC activations
                                   (row q = padded-grid position q//9, q%9)
    w_ref: (TAPS, CIN, COUT) bf16  per-tap weight matrices, tap = kh*3 + kw
    o_ref: (MOUT, COUT)      f32   conv outputs on the padded grid
    """
    acc = jnp.zeros((MOUT, COUT), jnp.float32)
    for kh in range(KH):
        for kw in range(KW):
            t = kh * KW + kw
            d = (kh - 1) * WP + (kw - 1)          # flattened tap offset in [-10, 10]
            start = QOUT0 + d                      # static, in [0, 20]
            # Contiguous 64-row slice; cast to bf16 so the MXU runs native bf16
            # passes while accumulating in f32.
            x_tap = x_ref[start:start + MOUT, :].astype(jnp.bfloat16)
            acc = acc + jnp.dot(x_tap, w_ref[t],
                                preferred_element_type=jnp.float32)
    o_ref[...] = acc


def prepare_weights(w_oihw):
    """One-time weight prep (kept OUT of the per-call path).

    (O, I, kh, kw) -> (kh, kw, I, O) -> (TAPS, CIN, COUT), cast to bf16.
    """
    return jnp.transpose(w_oihw, (2, 3, 1, 0)).reshape(TAPS, CIN, COUT).astype(jnp.bfloat16)


@jax.jit
def conv2d_3x3_pallas(x_nchw, w_taps):
    """x_nchw: (1, 128, 7, 7) f32; w_taps: (9, 128, 32) bf16 -> (1, 32, 7, 7) f32."""
    # ---- glue (fuses inside this jit): NCHW -> flattened zero-padded buffer ----
    x_hwc = jnp.transpose(x_nchw[0], (1, 2, 0))                    # (7, 7, 128)
    x_pad = jnp.pad(x_hwc, ((1, 1), (1, 1), (0, 0)))               # (9, 9, 128)
    x_buf = jnp.pad(x_pad.reshape(NGRID, CIN),
                    ((0, NBUF - NGRID), (0, 0)))                   # (88, 128)

    # ---- hot path: one kernel invocation, no grid, no pipeline machinery ----
    out_buf = pl.pallas_call(
        conv3x3_kernel,
        out_shape=jax.ShapeDtypeStruct((MOUT, COUT), jnp.float32),
        in_specs=[
            pl.BlockSpec(memory_space=pltpu.MemorySpace.VMEM),
            pl.BlockSpec(memory_space=pltpu.MemorySpace.VMEM),
        ],
        out_specs=pl.BlockSpec(memory_space=pltpu.MemorySpace.VMEM),
    )(x_buf, w_taps)

    # ---- glue (fuses inside this jit): pull the 49 valid pixels, back to NCHW ----
    # valid output pixel (ph, pw) lives at out_buf row 9*ph + pw
    out_hwc = out_buf[:(H - 1) * WP + W + 2].reshape(H, WP, COUT)[:, :W, :]  # (7,7,32)
    return jnp.transpose(out_hwc, (2, 0, 1))[None, ...]            # (1, 32, 7, 7)


if __name__ == "__main__":
    key = jax.random.PRNGKey(0)
    kx, kw = jax.random.split(key)

    # deterministic synthetic input / weights at the module's (already small) shapes
    x = jax.random.normal(kx, (1, CIN, H, W), dtype=jnp.float32)
    fan_in = CIN * KH * KW
    bound = (6.0 / fan_in) ** 0.5
    w = jax.random.uniform(kw, (COUT, CIN, KH, KW), dtype=jnp.float32,
                           minval=-bound, maxval=bound)

    # one-time weight layout prep (outside the per-call path)
    w_taps = prepare_weights(w)

    y = conv2d_3x3_pallas(x, w_taps)
    jax.block_until_ready(y)

    # Reference uses the SAME bf16-rounded operands (f32 accumulation), so the
    # comparison isolates kernel correctness from bf16 operand quantization.
    xq = x.astype(jnp.bfloat16).astype(jnp.float32)
    wq = w.astype(jnp.bfloat16).astype(jnp.float32)
    y_ref = jax.lax.conv_general_dilated(
        xq, wq, window_strides=(1, 1), padding=((1, 1), (1, 1)),
        dimension_numbers=("NCHW", "OIHW", "NCHW"),
        precision=jax.lax.Precision.HIGHEST,
    )
    assert y.shape == (1, COUT, H, W)
    assert jnp.allclose(y, y_ref, rtol=1e-3, atol=1e-3), "mismatch vs reference conv"

    print("KERNEL_OK")
</pallas_src>

<mosaic_0001>
module attributes {stable_mosaic.version = 11 : i64} {
  func.func @conv3x3_kernel(%arg0: memref<88x128xf32, #tpu.memory_space<vmem>>, %arg1: memref<9x128x32xbf16, #tpu.memory_space<vmem>>, %arg2: memref<64x32xf32, #tpu.memory_space<vmem>>) attributes {dimension_semantics = [], scalar_prefetch = 0 : i64, scratch_operands = 0 : i64, tpu.core_type = #tpu.core_type<tc>} {
    %cst = arith.constant 0.000000e+00 : f32
    %0 = vector.broadcast %cst : f32 to vector<64x32xf32>
    %c0 = arith.constant 0 : index
    %c0_0 = arith.constant 0 : index
    %1 = vector.load %arg0[%c0, %c0_0] : memref<88x128xf32, #tpu.memory_space<vmem>>, vector<64x128xf32>
    %2 = arith.truncf %1 : vector<64x128xf32> to vector<64x128xbf16>
    %c0_1 = arith.constant 0 : index
    %c0_2 = arith.constant 0 : index
    %c0_3 = arith.constant 0 : index
    %3 = vector.load %arg1[%c0_1, %c0_2, %c0_3] : memref<9x128x32xbf16, #tpu.memory_space<vmem>>, vector<1x128x32xbf16>
    %4 = vector.shape_cast %3 : vector<1x128x32xbf16> to vector<128x32xbf16>
    %cst_4 = arith.constant dense<0.000000e+00> : vector<64x32xf32>
    %5 = tpu.matmul %2, %4, %cst_4 {dimension_numbers = #tpu.dot_dimension_numbers<[1], [0], [0], [1], [0, 0, 1, 1], [], []>} : vector<64x128xbf16>, vector<128x32xbf16>, vector<64x32xf32> -> vector<64x32xf32>
    %6 = arith.addf %0, %5 : vector<64x32xf32>
    %c1 = arith.constant 1 : index
    %c0_5 = arith.constant 0 : index
    %7 = vector.load %arg0[%c1, %c0_5] : memref<88x128xf32, #tpu.memory_space<vmem>>, vector<64x128xf32>
    %8 = arith.truncf %7 : vector<64x128xf32> to vector<64x128xbf16>
    %c1_6 = arith.constant 1 : index
    %c0_7 = arith.constant 0 : index
    %c0_8 = arith.constant 0 : index
    %9 = vector.load %arg1[%c1_6, %c0_7, %c0_8] : memref<9x128x32xbf16, #tpu.memory_space<vmem>>, vector<1x128x32xbf16>
    %10 = vector.shape_cast %9 : vector<1x128x32xbf16> to vector<128x32xbf16>
    %cst_9 = arith.constant dense<0.000000e+00> : vector<64x32xf32>
    %11 = tpu.matmul %8, %10, %cst_9 {dimension_numbers = #tpu.dot_dimension_numbers<[1], [0], [0], [1], [0, 0, 1, 1], [], []>} : vector<64x128xbf16>, vector<128x32xbf16>, vector<64x32xf32> -> vector<64x32xf32>
    %12 = arith.addf %6, %11 : vector<64x32xf32>
    %c2 = arith.constant 2 : index
    %c0_10 = arith.constant 0 : index
    %13 = vector.load %arg0[%c2, %c0_10] : memref<88x128xf32, #tpu.memory_space<vmem>>, vector<64x128xf32>
    %14 = arith.truncf %13 : vector<64x128xf32> to vector<64x128xbf16>
    %c2_11 = arith.constant 2 : index
    %c0_12 = arith.constant 0 : index
    %c0_13 = arith.constant 0 : index
    %15 = vector.load %arg1[%c2_11, %c0_12, %c0_13] : memref<9x128x32xbf16, #tpu.memory_space<vmem>>, vector<1x128x32xbf16>
    %16 = vector.shape_cast %15 : vector<1x128x32xbf16> to vector<128x32xbf16>
    %cst_14 = arith.constant dense<0.000000e+00> : vector<64x32xf32>
    %17 = tpu.matmul %14, %16, %cst_14 {dimension_numbers = #tpu.dot_dimension_numbers<[1], [0], [0], [1], [0, 0, 1, 1], [], []>} : vector<64x128xbf16>, vector<128x32xbf16>, vector<64x32xf32> -> vector<64x32xf32>
    %18 = arith.addf %12, %17 : vector<64x32xf32>
    %c9 = arith.constant 9 : index
    %c0_15 = arith.constant 0 : index
    %19 = vector.load %arg0[%c9, %c0_15] : memref<88x128xf32, #tpu.memory_space<vmem>>, vector<64x128xf32>
    %20 = arith.truncf %19 : vector<64x128xf32> to vector<64x128xbf16>
    %c3 = arith.constant 3 : index
    %c0_16 = arith.constant 0 : index
    %c0_17 = arith.constant 0 : index
    %21 = vector.load %arg1[%c3, %c0_16, %c0_17] : memref<9x128x32xbf16, #tpu.memory_space<vmem>>, vector<1x128x32xbf16>
    %22 = vector.shape_cast %21 : vector<1x128x32xbf16> to vector<128x32xbf16>
    %cst_18 = arith.constant dense<0.000000e+00> : vector<64x32xf32>
    %23 = tpu.matmul %20, %22, %cst_18 {dimension_numbers = #tpu.dot_dimension_numbers<[1], [0], [0], [1], [0, 0, 1, 1], [], []>} : vector<64x128xbf16>, vector<128x32xbf16>, vector<64x32xf32> -> vector<64x32xf32>
    %24 = arith.addf %18, %23 : vector<64x32xf32>
    %c10 = arith.constant 10 : index
    %c0_19 = arith.constant 0 : index
    %25 = vector.load %arg0[%c10, %c0_19] : memref<88x128xf32, #tpu.memory_space<vmem>>, vector<64x128xf32>
    %26 = arith.truncf %25 : vector<64x128xf32> to vector<64x128xbf16>
    %c4 = arith.constant 4 : index
    %c0_20 = arith.constant 0 : index
    %c0_21 = arith.constant 0 : index
    %27 = vector.load %arg1[%c4, %c0_20, %c0_21] : memref<9x128x32xbf16, #tpu.memory_space<vmem>>, vector<1x128x32xbf16>
    %28 = vector.shape_cast %27 : vector<1x128x32xbf16> to vector<128x32xbf16>
    %cst_22 = arith.constant dense<0.000000e+00> : vector<64x32xf32>
    %29 = tpu.matmul %26, %28, %cst_22 {dimension_numbers = #tpu.dot_dimension_numbers<[1], [0], [0], [1], [0, 0, 1, 1], [], []>} : vector<64x128xbf16>, vector<128x32xbf16>, vector<64x32xf32> -> vector<64x32xf32>
    %30 = arith.addf %24, %29 : vector<64x32xf32>
    %c11 = arith.constant 11 : index
    %c0_23 = arith.constant 0 : index
    %31 = vector.load %arg0[%c11, %c0_23] : memref<88x128xf32, #tpu.memory_space<vmem>>, vector<64x128xf32>
    %32 = arith.truncf %31 : vector<64x128xf32> to vector<64x128xbf16>
    %c5 = arith.constant 5 : index
    %c0_24 = arith.constant 0 : index
    %c0_25 = arith.constant 0 : index
    %33 = vector.load %arg1[%c5, %c0_24, %c0_25] : memref<9x128x32xbf16, #tpu.memory_space<vmem>>, vector<1x128x32xbf16>
    %34 = vector.shape_cast %33 : vector<1x128x32xbf16> to vector<128x32xbf16>
    %cst_26 = arith.constant dense<0.000000e+00> : vector<64x32xf32>
    %35 = tpu.matmul %32, %34, %cst_26 {dimension_numbers = #tpu.dot_dimension_numbers<[1], [0], [0], [1], [0, 0, 1, 1], [], []>} : vector<64x128xbf16>, vector<128x32xbf16>, vector<64x32xf32> -> vector<64x32xf32>
    %36 = arith.addf %30, %35 : vector<64x32xf32>
    %c18 = arith.constant 18 : index
    %c0_27 = arith.constant 0 : index
    %37 = vector.load %arg0[%c18, %c0_27] : memref<88x128xf32, #tpu.memory_space<vmem>>, vector<64x128xf32>
    %38 = arith.truncf %37 : vector<64x128xf32> to vector<64x128xbf16>
    %c6 = arith.constant 6 : index
    %c0_28 = arith.constant 0 : index
    %c0_29 = arith.constant 0 : index
    %39 = vector.load %arg1[%c6, %c0_28, %c0_29] : memref<9x128x32xbf16, #tpu.memory_space<vmem>>, vector<1x128x32xbf16>
    %40 = vector.shape_cast %39 : vector<1x128x32xbf16> to vector<128x32xbf16>
    %cst_30 = arith.constant dense<0.000000e+00> : vector<64x32xf32>
    %41 = tpu.matmul %38, %40, %cst_30 {dimension_numbers = #tpu.dot_dimension_numbers<[1], [0], [0], [1], [0, 0, 1, 1], [], []>} : vector<64x128xbf16>, vector<128x32xbf16>, vector<64x32xf32> -> vector<64x32xf32>
    %42 = arith.addf %36, %41 : vector<64x32xf32>
    %c19 = arith.constant 19 : index
    %c0_31 = arith.constant 0 : index
    %43 = vector.load %arg0[%c19, %c0_31] : memref<88x128xf32, #tpu.memory_space<vmem>>, vector<64x128xf32>
    %44 = arith.truncf %43 : vector<64x128xf32> to vector<64x128xbf16>
    %c7 = arith.constant 7 : index
    %c0_32 = arith.constant 0 : index
    %c0_33 = arith.constant 0 : index
    %45 = vector.load %arg1[%c7, %c0_32, %c0_33] : memref<9x128x32xbf16, #tpu.memory_space<vmem>>, vector<1x128x32xbf16>
    %46 = vector.shape_cast %45 : vector<1x128x32xbf16> to vector<128x32xbf16>
    %cst_34 = arith.constant dense<0.000000e+00> : vector<64x32xf32>
    %47 = tpu.matmul %44, %46, %cst_34 {dimension_numbers = #tpu.dot_dimension_numbers<[1], [0], [0], [1], [0, 0, 1, 1], [], []>} : vector<64x128xbf16>, vector<128x32xbf16>, vector<64x32xf32> -> vector<64x32xf32>
    %48 = arith.addf %42, %47 : vector<64x32xf32>
    %c20 = arith.constant 20 : index
    %c0_35 = arith.constant 0 : index
    %49 = vector.load %arg0[%c20, %c0_35] : memref<88x128xf32, #tpu.memory_space<vmem>>, vector<64x128xf32>
    %50 = arith.truncf %49 : vector<64x128xf32> to vector<64x128xbf16>
    %c8 = arith.constant 8 : index
    %c0_36 = arith.constant 0 : index
    %c0_37 = arith.constant 0 : index
    %51 = vector.load %arg1[%c8, %c0_36, %c0_37] : memref<9x128x32xbf16, #tpu.memory_space<vmem>>, vector<1x128x32xbf16>
    %52 = vector.shape_cast %51 : vector<1x128x32xbf16> to vector<128x32xbf16>
    %cst_38 = arith.constant dense<0.000000e+00> : vector<64x32xf32>
    %53 = tpu.matmul %50, %52, %cst_38 {dimension_numbers = #tpu.dot_dimension_numbers<[1], [0], [0], [1], [0, 0, 1, 1], [], []>} : vector<64x128xbf16>, vector<128x32xbf16>, vector<64x32xf32> -> vector<64x32xf32>
    %54 = arith.addf %48, %53 : vector<64x32xf32>
    %c0_39 = arith.constant 0 : index
    %c0_40 = arith.constant 0 : index
    %55 = vector.load %arg2[%c0_39, %c0_40] : memref<64x32xf32, #tpu.memory_space<vmem>>, vector<64x32xf32>
    tpu.vector_store %arg2[%c0_39, %c0_40], %54 {strides = array<i32>} : memref<64x32xf32, #tpu.memory_space<vmem>>, vector<64x32xf32>,
    return
  }
}

</mosaic_0001>

<llo_original>
// kernel: conv2d_3x3_pallas.1
$region0: #{conv2d_3x3_pallas.1}
  #allocation0 [shape = 'u32[]', space=smem, size = 0x4, offset = 0x4, fixed_abs, tag = 'smem constant byte address 0x4 - core index']
  #allocation1 [shape = 'u32[144,128]{1,0:T(1,128)}', space=vmem, size = 0x12000, scoped, tag = 'internal scratch']
  %s0 = inlined_call_operand.vmem [shape: f32[88,128], index: 0, kind: input, shape index: {}]
  %s1 = inlined_call_operand.vmem [shape: bf16[9,128,32], index: 1, kind: input, shape index: {}]
  %s2 = inlined_call_operand.vmem [shape: f32[64,32], index: 2, kind: output, shape index: {}]
  %s3 = sld [smem:[#allocation0]]
  $region18: #{conv2d_3x3_pallas.1} parent=0
    _
  %s5 = ssub.s32 1, %s3
  %s6 = scalar_select 0, %s5, %s3
  // Predicated region
  $region2: #{conv2d_3x3_pallas.1} parent=0 // pred_check
    _
  $region3: #{conv2d_3x3_pallas.1} parent=0 // pred_check_branch
    %8 = sbr.rel (0) target = $region5
  $region4: #{conv2d_3x3_pallas.1} parent=0 // pred_region
    _
  $region5: #{conv2d_3x3_pallas.1} parent=0 // pred_fallthru
    _
  // Predicated region
  $region6: #{conv2d_3x3_pallas.1} parent=0 // pred_check
    _
  $region7: #{conv2d_3x3_pallas.1} parent=0 // pred_check_branch
    %10 = sbr.rel (0) target = $region9
  $region8: #{conv2d_3x3_pallas.1} parent=0 // pred_region
    _
  $region9: #{conv2d_3x3_pallas.1} parent=0 // pred_fallthru
    _
  %v12 = vld [vmem:[%s0] sm:$0xff]
  %v13 = vld [vmem:[%s0 + $0x8] sm:$0xff]
  %v14 = vld [vmem:[%s0 + $0x10] sm:$0xff]
  %v15 = vld [vmem:[%s0 + $0x18] sm:$0xff]
  %v16 = vld [vmem:[%s0 + $0x20] sm:$0xff]
  %v17 = vld [vmem:[%s0 + $0x28] sm:$0xff]
  %v18 = vld [vmem:[%s0 + $0x30] sm:$0xff]
  %v19 = vld [vmem:[%s0 + $0x38] sm:$0xff]
  %v20 = vpack.c.bf16 %v13, %v12
  %v21 = vpack.c.bf16 %v15, %v14
  %v22 = vpack.c.bf16 %v17, %v16
  %v23 = vpack.c.bf16 %v19, %v18
  %v24 = vld [vmem:[%s1] sm:$0xf]
  %v25 = vld [vmem:[%s1 + $0x4] sm:$0xf]
  %v26 = vld [vmem:[%s1 + $0x8] sm:$0xf]
  %v27 = vld [vmem:[%s1 + $0xc] sm:$0xf]
  %v28 = vld [vmem:[%s1 + $0x10] sm:$0xf]
  %v29 = vld [vmem:[%s1 + $0x14] sm:$0xf]
  %v30 = vld [vmem:[%s1 + $0x18] sm:$0xf]
  %v31 = vld [vmem:[%s1 + $0x1c] sm:$0xf]
  %v32 = vld [vmem:[%s1 + $0x20] sm:$0xf]
  %v33 = vld [vmem:[%s1 + $0x24] sm:$0xf]
  %v34 = vld [vmem:[%s1 + $0x28] sm:$0xf]
  %v35 = vld [vmem:[%s1 + $0x2c] sm:$0xf]
  %v36 = vld [vmem:[%s1 + $0x30] sm:$0xf]
  %v37 = vld [vmem:[%s1 + $0x34] sm:$0xf]
  %v38 = vld [vmem:[%s1 + $0x38] sm:$0xf]
  %v39 = vld [vmem:[%s1 + $0x3c] sm:$0xf]
  %v40 = vld [vmem:[%s0 + $0x1] sm:$0xff]
  %v41 = vld [vmem:[%s0 + $0x9] sm:$0xff]
  %v42 = vld [vmem:[%s0 + $0x11] sm:$0xff]
  %v43 = vld [vmem:[%s0 + $0x19] sm:$0xff]
  %v44 = vld [vmem:[%s0 + $0x21] sm:$0xff]
  %v45 = vld [vmem:[%s0 + $0x29] sm:$0xff]
  %v46 = vld [vmem:[%s0 + $0x31] sm:$0xff]
  %v47 = vld [vmem:[%s0 + $0x39] sm:$0xff]
  %v48 = vpack.c.bf16 %v41, %v40
  %v49 = vpack.c.bf16 %v43, %v42
  %v50 = vpack.c.bf16 %v45, %v44
  %v51 = vpack.c.bf16 %v47, %v46
  %s52 = scalar_lea.vmem %s1, 64
  %v53 = vld [vmem:[%s52] sm:$0xf]
  %v54 = vld [vmem:[%s52 + $0x4] sm:$0xf]
  %v55 = vld [vmem:[%s52 + $0x8] sm:$0xf]
  %v56 = vld [vmem:[%s52 + $0xc] sm:$0xf]
  %v57 = vld [vmem:[%s52 + $0x10] sm:$0xf]
  %v58 = vld [vmem:[%s52 + $0x14] sm:$0xf]
  %v59 = vld [vmem:[%s52 + $0x18] sm:$0xf]
  %v60 = vld [vmem:[%s52 + $0x1c] sm:$0xf]
  %v61 = vld [vmem:[%s52 + $0x20] sm:$0xf]
  %v62 = vld [vmem:[%s52 + $0x24] sm:$0xf]
  %v63 = vld [vmem:[%s52 + $0x28] sm:$0xf]
  %v64 = vld [vmem:[%s52 + $0x2c] sm:$0xf]
  %v65 = vld [vmem:[%s52 + $0x30] sm:$0xf]
  %v66 = vld [vmem:[%s52 + $0x34] sm:$0xf]
  %v67 = vld [vmem:[%s52 + $0x38] sm:$0xf]
  %v68 = vld [vmem:[%s52 + $0x3c] sm:$0xf]
  %v85 = vunpack.c.l.b16 %v53
  %v86 = vunpack.c.l.b16 %v54
  %v87 = vunpack.c.l.b16 %v55
  %v88 = vunpack.c.l.b16 %v56
  %v89 = vunpack.c.l.b16 %v57
  %v90 = vunpack.c.l.b16 %v58
  %v91 = vunpack.c.l.b16 %v59
  %v92 = vunpack.c.l.b16 %v60
  %v93 = vunpack.c.l.b16 %v61
  %v94 = vunpack.c.l.b16 %v62
  %v95 = vunpack.c.l.b16 %v63
  %v96 = vunpack.c.l.b16 %v64
  %v97 = vunpack.c.l.b16 %v65
  %v98 = vunpack.c.l.b16 %v66
  %v99 = vunpack.c.l.b16 %v67
  %v100 = vunpack.c.l.b16 %v68
  %v101 = vpack.c.b16 %v86, %v85
  %v102 = vpack.c.b16 %v88, %v87
  %v103 = vpack.c.b16 %v90, %v89
  %v104 = vpack.c.b16 %v92, %v91
  %v105 = vpack.c.b16 %v94, %v93
  %v106 = vpack.c.b16 %v96, %v95
  %v107 = vpack.c.b16 %v98, %v97
  %v108 = vpack.c.b16 %v100, %v99
  %117 = vmatprep.subr.bf16.mxu0 0
  %118 = vmatpush1.bf16.msra.mxu0 %v108
  %119 = vmatprep.subr.bf16.mxu0 0
  %120 = vmatpush1.bf16.msra.mxu0 %v107
  %121 = vmatprep.subr.bf16.mxu0 0
  %122 = vmatpush1.bf16.msra.mxu0 %v106
  %123 = vmatprep.subr.bf16.mxu0 0
  %124 = vmatpush1.bf16.msra.mxu0 %v105
  %125 = vmatprep.subr.bf16.mxu0 0
  %126 = vmatpush1.bf16.msra.mxu0 %v104
  %127 = vmatprep.subr.bf16.mxu0 0
  %128 = vmatpush1.bf16.msra.mxu0 %v103
  %129 = vmatprep.subr.bf16.mxu0 0
  %130 = vmatpush1.bf16.msra.mxu0 %v102
  %131 = vmatprep.subr.bf16.mxu0 0
  %132 = vmatpush1.bf16.msra.mxu0 %v101
  %133 = vmatprep.subr.bf16.mxu0 0
  %134 = vmatpush2.bf16.msra.mxu0 0
  %135 = vmatprep.subr.bf16.mxu0 0
  %136 = vmatpush2.bf16.msra.mxu0 0
  %137 = vmatprep.subr.bf16.mxu0 0
  %138 = vmatpush2.bf16.msra.mxu0 0
  %139 = vmatprep.subr.bf16.mxu0 0
  %140 = vmatpush2.bf16.msra.mxu0 0
  %141 = vmatprep.subr.bf16.mxu0 0
  %142 = vmatpush2.bf16.msra.mxu0 0
  %143 = vmatprep.subr.bf16.mxu0 0
  %144 = vmatpush2.bf16.msra.mxu0 0
  %145 = vmatprep.subr.bf16.mxu0 0
  %146 = vmatpush2.bf16.msra.mxu0 0
  %147 = vmatprep.subr.bf16.mxu0 0
  %148 = vmatpush2.bf16.msra.mxu0 0
  %149 = vmatprep.mubr.bf16.mxu0 0
  %150 = vmatmul.mubr.bf16.gmra.mxu0 %v48
  %v151 = vpop.f32.mrf.mxu0
  %v152 = vadd.f32 0.0, %v151
  %v153 = vpop.f32.mrf.mxu0
  %v154 = vpop.f32.mrf.mxu0
  %v155 = vadd.f32 0.0, %v154
  %v156 = vpop.f32.mrf.mxu0
  %157 = vmatprep.mubr.bf16.mxu0 0
  %158 = vmatmul.mubr.bf16.gmra.mxu0 %v49
  %v159 = vpop.f32.mrf.mxu0
  %v160 = vadd.f32 0.0, %v159
  %v161 = vpop.f32.mrf.mxu0
  %v162 = vpop.f32.mrf.mxu0
  %v163 = vadd.f32 0.0, %v162
  %v164 = vpop.f32.mrf.mxu0
  %165 = vmatprep.mubr.bf16.mxu0 0
  %166 = vmatmul.mubr.bf16.gmra.mxu0 %v50
  %v167 = vpop.f32.mrf.mxu0
  %v168 = vadd.f32 0.0, %v167
  %v169 = vpop.f32.mrf.mxu0
  %v170 = vpop.f32.mrf.mxu0
  %v171 = vadd.f32 0.0, %v170
  %v172 = vpop.f32.mrf.mxu0
  %173 = vmatprep.mubr.bf16.mxu0 0
  %174 = vmatmul.mubr.bf16.gmra.mxu0 %v51
  %v175 = vpop.f32.mrf.mxu0
  %v176 = vadd.f32 0.0, %v175
  %v177 = vpop.f32.mrf.mxu0
  %v178 = vpop.f32.mrf.mxu0
  %v179 = vadd.f32 0.0, %v178
  %v180 = vpop.f32.mrf.mxu0
  %181 = vdwg.mxu0
  %v198 = vunpack.c.l.b16 %v24
  %v199 = vunpack.c.l.b16 %v25
  %v200 = vunpack.c.l.b16 %v26
  %v201 = vunpack.c.l.b16 %v27
  %v202 = vunpack.c.l.b16 %v28
  %v203 = vunpack.c.l.b16 %v29
  %v204 = vunpack.c.l.b16 %v30
  %v205 = vunpack.c.l.b16 %v31
  %v206 = vunpack.c.l.b16 %v32
  %v207 = vunpack.c.l.b16 %v33
  %v208 = vunpack.c.l.b16 %v34
  %v209 = vunpack.c.l.b16 %v35
  %v210 = vunpack.c.l.b16 %v36
  %v211 = vunpack.c.l.b16 %v37
  %v212 = vunpack.c.l.b16 %v38
  %v213 = vunpack.c.l.b16 %v39
  %v214 = vpack.c.b16 %v199, %v198
  %v215 = vpack.c.b16 %v201, %v200
  %v216 = vpack.c.b16 %v203, %v202
  %v217 = vpack.c.b16 %v205, %v204
  %v218 = vpack.c.b16 %v207, %v206
  %v219 = vpack.c.b16 %v209, %v208
  %v220 = vpack.c.b16 %v211, %v210
  %v221 = vpack.c.b16 %v213, %v212
  %230 = vmatprep.subr.bf16.mxu0 0
  %231 = vmatpush1.bf16.msra.mxu0 %v221
  %232 = vmatprep.subr.bf16.mxu0 0
  %233 = vmatpush1.bf16.msra.mxu0 %v220
  %234 = vmatprep.subr.bf16.mxu0 0
  %235 = vmatpush1.bf16.msra.mxu0 %v219
  %236 = vmatprep.subr.bf16.mxu0 0
  %237 = vmatpush1.bf16.msra.mxu0 %v218
  %238 = vmatprep.subr.bf16.mxu0 0
  %239 = vmatpush1.bf16.msra.mxu0 %v217
  %240 = vmatprep.subr.bf16.mxu0 0
  %241 = vmatpush1.bf16.msra.mxu0 %v216
  %242 = vmatprep.subr.bf16.mxu0 0
  %243 = vmatpush1.bf16.msra.mxu0 %v215
  %244 = vmatprep.subr.bf16.mxu0 0
  %245 = vmatpush1.bf16.msra.mxu0 %v214
  %246 = vmatprep.subr.bf16.mxu0 0
  %247 = vmatpush2.bf16.msra.mxu0 0
  %248 = vmatprep.subr.bf16.mxu0 0
  %249 = vmatpush2.bf16.msra.mxu0 0
  %250 = vmatprep.subr.bf16.mxu0 0
  %251 = vmatpush2.bf16.msra.mxu0 0
  %252 = vmatprep.subr.bf16.mxu0 0
  %253 = vmatpush2.bf16.msra.mxu0 0
  %254 = vmatprep.subr.bf16.mxu0 0
  %255 = vmatpush2.bf16.msra.mxu0 0
  %256 = vmatprep.subr.bf16.mxu0 0
  %257 = vmatpush2.bf16.msra.mxu0 0
  %258 = vmatprep.subr.bf16.mxu0 0
  %259 = vmatpush2.bf16.msra.mxu0 0
  %260 = vmatprep.subr.bf16.mxu0 0
  %261 = vmatpush2.bf16.msra.mxu0 0
  %262 = vmatprep.mubr.bf16.mxu0 0
  %263 = vmatmul.mubr.bf16.gmra.mxu0 %v20
  %v264 = vpop.f32.mrf.mxu0
  %v265 = vadd.f32 %v152, %v264
  %v266 = vpop.f32.mrf.mxu0
  %v267 = vpop.f32.mrf.mxu0
  %v268 = vadd.f32 %v155, %v267
  %v269 = vpop.f32.mrf.mxu0
  %270 = vmatprep.mubr.bf16.mxu0 0
  %271 = vmatmul.mubr.bf16.gmra.mxu0 %v21
  %v272 = vpop.f32.mrf.mxu0
  %v273 = vadd.f32 %v160, %v272
  %v274 = vpop.f32.mrf.mxu0
  %v275 = vpop.f32.mrf.mxu0
  %v276 = vadd.f32 %v163, %v275
  %v277 = vpop.f32.mrf.mxu0
  %278 = vmatprep.mubr.bf16.mxu0 0
  %279 = vmatmul.mubr.bf16.gmra.mxu0 %v22
  %v280 = vpop.f32.mrf.mxu0
  %v281 = vadd.f32 %v168, %v280
  %v282 = vpop.f32.mrf.mxu0
  %v283 = vpop.f32.mrf.mxu0
  %v284 = vadd.f32 %v171, %v283
  %v285 = vpop.f32.mrf.mxu0
  %286 = vmatprep.mubr.bf16.mxu0 0
  %287 = vmatmul.mubr.bf16.gmra.mxu0 %v23
  %v288 = vpop.f32.mrf.mxu0
  %v289 = vadd.f32 %v176, %v288
  %v290 = vpop.f32.mrf.mxu0
  %v291 = vpop.f32.mrf.mxu0
  %v292 = vadd.f32 %v179, %v291
  %v293 = vpop.f32.mrf.mxu0
  %294 = vdwg.mxu0
  %v295 = vld [vmem:[%s0 + $0x2] sm:$0xff]
  %v296 = vld [vmem:[%s0 + $0xa] sm:$0xff]
  %v297 = vld [vmem:[%s0 + $0x12] sm:$0xff]
  %v298 = vld [vmem:[%s0 + $0x1a] sm:$0xff]
  %v299 = vld [vmem:[%s0 + $0x22] sm:$0xff]
  %v300 = vld [vmem:[%s0 + $0x2a] sm:$0xff]
  %v301 = vld [vmem:[%s0 + $0x32] sm:$0xff]
  %v302 = vld [vmem:[%s0 + $0x3a] sm:$0xff]
  %v303 = vpack.c.bf16 %v296, %v295
  %v304 = vpack.c.bf16 %v298, %v297
  %v305 = vpack.c.bf16 %v300, %v299
  %v306 = vpack.c.bf16 %v302, %v301
  %s307 = scalar_lea.vmem %s1, 128
  %v308 = vld [vmem:[%s307] sm:$0xf]
  %v309 = vld [vmem:[%s307 + $0x4] sm:$0xf]
  %v310 = vld [vmem:[%s307 + $0x8] sm:$0xf]
  %v311 = vld [vmem:[%s307 + $0xc] sm:$0xf]
  %v312 = vld [vmem:[%s307 + $0x10] sm:$0xf]
  %v313 = vld [vmem:[%s307 + $0x14] sm:$0xf]
  %v314 = vld [vmem:[%s307 + $0x18] sm:$0xf]
  %v315 = vld [vmem:[%s307 + $0x1c] sm:$0xf]
  %v316 = vld [vmem:[%s307 + $0x20] sm:$0xf]
  %v317 = vld [vmem:[%s307 + $0x24] sm:$0xf]
  %v318 = vld [vmem:[%s307 + $0x28] sm:$0xf]
  %v319 = vld [vmem:[%s307 + $0x2c] sm:$0xf]
  %v320 = vld [vmem:[%s307 + $0x30] sm:$0xf]
  %v321 = vld [vmem:[%s307 + $0x34] sm:$0xf]
  %v322 = vld [vmem:[%s307 + $0x38] sm:$0xf]
  %v323 = vld [vmem:[%s307 + $0x3c] sm:$0xf]
  %v340 = vunpack.c.l.b16 %v308
  %v341 = vunpack.c.l.b16 %v309
  %v342 = vunpack.c.l.b16 %v310
  %v343 = vunpack.c.l.b16 %v311
  %v344 = vunpack.c.l.b16 %v312
  %v345 = vunpack.c.l.b16 %v313
  %v346 = vunpack.c.l.b16 %v314
  %v347 = vunpack.c.l.b16 %v315
  %v348 = vunpack.c.l.b16 %v316
  %v349 = vunpack.c.l.b16 %v317
  %v350 = vunpack.c.l.b16 %v318
  %v351 = vunpack.c.l.b16 %v319
  %v352 = vunpack.c.l.b16 %v320
  %v353 = vunpack.c.l.b16 %v321
  %v354 = vunpack.c.l.b16 %v322
  %v355 = vunpack.c.l.b16 %v323
  %v356 = vpack.c.b16 %v341, %v340
  %v357 = vpack.c.b16 %v343, %v342
  %v358 = vpack.c.b16 %v345, %v344
  %v359 = vpack.c.b16 %v347, %v346
  %v360 = vpack.c.b16 %v349, %v348
  %v361 = vpack.c.b16 %v351, %v350
  %v362 = vpack.c.b16 %v353, %v352
  %v363 = vpack.c.b16 %v355, %v354
  %372 = vmatprep.subr.bf16.mxu0 0
  %373 = vmatpush1.bf16.msra.mxu0 %v363
  %374 = vmatprep.subr.bf16.mxu0 0
  %375 = vmatpush1.bf16.msra.mxu0 %v362
  %376 = vmatprep.subr.bf16.mxu0 0
  %377 = vmatpush1.bf16.msra.mxu0 %v361
  %378 = vmatprep.subr.bf16.mxu0 0
  %379 = vmatpush1.bf16.msra.mxu0 %v360
  %380 = vmatprep.subr.bf16.mxu0 0
  %381 = vmatpush1.bf16.msra.mxu0 %v359
  %382 = vmatprep.subr.bf16.mxu0 0
  %383 = vmatpush1.bf16.msra.mxu0 %v358
  %384 = vmatprep.subr.bf16.mxu0 0
  %385 = vmatpush1.bf16.msra.mxu0 %v357
  %386 = vmatprep.subr.bf16.mxu0 0
  %387 = vmatpush1.bf16.msra.mxu0 %v356
  %388 = vmatprep.subr.bf16.mxu0 0
  %389 = vmatpush2.bf16.msra.mxu0 0
  %390 = vmatprep.subr.bf16.mxu0 0
  %391 = vmatpush2.bf16.msra.mxu0 0
  %392 = vmatprep.subr.bf16.mxu0 0
  %393 = vmatpush2.bf16.msra.mxu0 0
  %394 = vmatprep.subr.bf16.mxu0 0
  %395 = vmatpush2.bf16.msra.mxu0 0
  %396 = vmatprep.subr.bf16.mxu0 0
  %397 = vmatpush2.bf16.msra.mxu0 0
  %398 = vmatprep.subr.bf16.mxu0 0
  %399 = vmatpush2.bf16.msra.mxu0 0
  %400 = vmatprep.subr.bf16.mxu0 0
  %401 = vmatpush2.bf16.msra.mxu0 0
  %402 = vmatprep.subr.bf16.mxu0 0
  %403 = vmatpush2.bf16.msra.mxu0 0
  %404 = vmatprep.mubr.bf16.mxu0 0
  %405 = vmatmul.mubr.bf16.gmra.mxu0 %v303
  %v406 = vpop.f32.mrf.mxu0
  %v407 = vadd.f32 0.0, %v406
  %v408 = vpop.f32.mrf.mxu0
  %v409 = vpop.f32.mrf.mxu0
  %v410 = vadd.f32 0.0, %v409
  %v411 = vpop.f32.mrf.mxu0
  %412 = vmatprep.mubr.bf16.mxu0 0
  %413 = vmatmul.mubr.bf16.gmra.mxu0 %v304
  %v414 = vpop.f32.mrf.mxu0
  %v415 = vadd.f32 0.0, %v414
  %v416 = vpop.f32.mrf.mxu0
  %v417 = vpop.f32.mrf.mxu0
  %v418 = vadd.f32 0.0, %v417
  %v419 = vpop.f32.mrf.mxu0
  %420 = vmatprep.mubr.bf16.mxu0 0
  %421 = vmatmul.mubr.bf16.gmra.mxu0 %v305
  %v422 = vpop.f32.mrf.mxu0
  %v423 = vadd.f32 0.0, %v422
  %v424 = vpop.f32.mrf.mxu0
  %v425 = vpop.f32.mrf.mxu0
  %v426 = vadd.f32 0.0, %v425
  %v427 = vpop.f32.mrf.mxu0
  %428 = vmatprep.mubr.bf16.mxu0 0
  %429 = vmatmul.mubr.bf16.gmra.mxu0 %v306
  %v430 = vpop.f32.mrf.mxu0
  %v431 = vadd.f32 0.0, %v430
  %v432 = vpop.f32.mrf.mxu0
  %v433 = vpop.f32.mrf.mxu0
  %v434 = vadd.f32 0.0, %v433
  %v435 = vpop.f32.mrf.mxu0
  %436 = vdwg.mxu0
  %v437 = vadd.f32 %v265, %v407
  %v438 = vadd.f32 %v268, %v410
  %v439 = vadd.f32 %v273, %v415
  %v440 = vadd.f32 %v276, %v418
  %v441 = vadd.f32 %v281, %v423
  %v442 = vadd.f32 %v284, %v426
  %v443 = vadd.f32 %v289, %v431
  %v444 = vadd.f32 %v292, %v434
  %v445 = vld [vmem:[%s0 + $0x9] sm:$0xff]
  %v446 = vld [vmem:[%s0 + $0x11] sm:$0xff]
  %v447 = vld [vmem:[%s0 + $0x19] sm:$0xff]
  %v448 = vld [vmem:[%s0 + $0x21] sm:$0xff]
  %v449 = vld [vmem:[%s0 + $0x29] sm:$0xff]
  %v450 = vld [vmem:[%s0 + $0x31] sm:$0xff]
  %v451 = vld [vmem:[%s0 + $0x39] sm:$0xff]
  %v452 = vld [vmem:[%s0 + $0x41] sm:$0xff]
  %v453 = vpack.c.bf16 %v446, %v445
  %v454 = vpack.c.bf16 %v448, %v447
  %v455 = vpack.c.bf16 %v450, %v449
  %v456 = vpack.c.bf16 %v452, %v451
  %s457 = scalar_lea.vmem %s1, 192
  %v458 = vld [vmem:[%s457] sm:$0xf]
  %v459 = vld [vmem:[%s457 + $0x4] sm:$0xf]
  %v460 = vld [vmem:[%s457 + $0x8] sm:$0xf]
  %v461 = vld [vmem:[%s457 + $0xc] sm:$0xf]
  %v462 = vld [vmem:[%s457 + $0x10] sm:$0xf]
  %v463 = vld [vmem:[%s457 + $0x14] sm:$0xf]
  %v464 = vld [vmem:[%s457 + $0x18] sm:$0xf]
  %v465 = vld [vmem:[%s457 + $0x1c] sm:$0xf]
  %v466 = vld [vmem:[%s457 + $0x20] sm:$0xf]
  %v467 = vld [vmem:[%s457 + $0x24] sm:$0xf]
  %v468 = vld [vmem:[%s457 + $0x28] sm:$0xf]
  %v469 = vld [vmem:[%s457 + $0x2c] sm:$0xf]
  %v470 = vld [vmem:[%s457 + $0x30] sm:$0xf]
  %v471 = vld [vmem:[%s457 + $0x34] sm:$0xf]
  %v472 = vld [vmem:[%s457 + $0x38] sm:$0xf]
  %v473 = vld [vmem:[%s457 + $0x3c] sm:$0xf]
  %v490 = vunpack.c.l.b16 %v458
  %v491 = vunpack.c.l.b16 %v459
  %v492 = vunpack.c.l.b16 %v460
  %v493 = vunpack.c.l.b16 %v461
  %v494 = vunpack.c.l.b16 %v462
  %v495 = vunpack.c.l.b16 %v463
  %v496 = vunpack.c.l.b16 %v464
  %v497 = vunpack.c.l.b16 %v465
  %v498 = vunpack.c.l.b16 %v466
  %v499 = vunpack.c.l.b16 %v467
  %v500 = vunpack.c.l.b16 %v468
  %v501 = vunpack.c.l.b16 %v469
  %v502 = vunpack.c.l.b16 %v470
  %v503 = vunpack.c.l.b16 %v471
  %v504 = vunpack.c.l.b16 %v472
  %v505 = vunpack.c.l.b16 %v473
  %v506 = vpack.c.b16 %v491, %v490
  %v507 = vpack.c.b16 %v493, %v492
  %v508 = vpack.c.b16 %v495, %v494
  %v509 = vpack.c.b16 %v497, %v496
  %v510 = vpack.c.b16 %v499, %v498
  %v511 = vpack.c.b16 %v501, %v500
  %v512 = vpack.c.b16 %v503, %v502
  %v513 = vpack.c.b16 %v505, %v504
  %522 = vmatprep.subr.bf16.mxu0 0
  %523 = vmatpush1.bf16.msra.mxu0 %v513
  %524 = vmatprep.subr.bf16.mxu0 0
  %525 = vmatpush1.bf16.msra.mxu0 %v512
  %526 = vmatprep.subr.bf16.mxu0 0
  %527 = vmatpush1.bf16.msra.mxu0 %v511
  %528 = vmatprep.subr.bf16.mxu0 0
  %529 = vmatpush1.bf16.msra.mxu0 %v510
  %530 = vmatprep.subr.bf16.mxu0 0
  %531 = vmatpush1.bf16.msra.mxu0 %v509
  %532 = vmatprep.subr.bf16.mxu0 0
  %533 = vmatpush1.bf16.msra.mxu0 %v508
  %534 = vmatprep.subr.bf16.mxu0 0
  %535 = vmatpush1.bf16.msra.mxu0 %v507
  %536 = vmatprep.subr.bf16.mxu0 0
  %537 = vmatpush1.bf16.msra.mxu0 %v506
  %538 = vmatprep.subr.bf16.mxu0 0
  %539 = vmatpush2.bf16.msra.mxu0 0
  %540 = vmatprep.subr.bf16.mxu0 0
  %541 = vmatpush2.bf16.msra.mxu0 0
  %542 = vmatprep.subr.bf16.mxu0 0
  %543 = vmatpush2.bf16.msra.mxu0 0
  %544 = vmatprep.subr.bf16.mxu0 0
  %545 = vmatpush2.bf16.msra.mxu0 0
  %546 = vmatprep.subr.bf16.mxu0 0
  %547 = vmatpush2.bf16.msra.mxu0 0
  %548 = vmatprep.subr.bf16.mxu0 0
  %549 = vmatpush2.bf16.msra.mxu0 0
  %550 = vmatprep.subr.bf16.mxu0 0
  %551 = vmatpush2.bf16.msra.mxu0 0
  %552 = vmatprep.subr.bf16.mxu0 0
  %553 = vmatpush2.bf16.msra.mxu0 0
  %554 = vmatprep.mubr.bf16.mxu0 0
  %555 = vmatmul.mubr.bf16.gmra.mxu0 %v453
  %v556 = vpop.f32.mrf.mxu0
  %v557 = vadd.f32 0.0, %v556
  %v558 = vpop.f32.mrf.mxu0
  %v559 = vpop.f32.mrf.mxu0
  %v560 = vadd.f32 0.0, %v559
  %v561 = vpop.f32.mrf.mxu0
  %562 = vmatprep.mubr.bf16.mxu0 0
  %563 = vmatmul.mubr.bf16.gmra.mxu0 %v454
  %v564 = vpop.f32.mrf.mxu0
  %v565 = vadd.f32 0.0, %v564
  %v566 = vpop.f32.mrf.mxu0
  %v567 = vpop.f32.mrf.mxu0
  %v568 = vadd.f32 0.0, %v567
  %v569 = vpop.f32.mrf.mxu0
  %570 = vmatprep.mubr.bf16.mxu0 0
  %571 = vmatmul.mubr.bf16.gmra.mxu0 %v455
  %v572 = vpop.f32.mrf.mxu0
  %v573 = vadd.f32 0.0, %v572
  %v574 = vpop.f32.mrf.mxu0
  %v575 = vpop.f32.mrf.mxu0
  %v576 = vadd.f32 0.0, %v575
  %v577 = vpop.f32.mrf.mxu0
  %578 = vmatprep.mubr.bf16.mxu0 0
  %579 = vmatmul.mubr.bf16.gmra.mxu0 %v456
  %v580 = vpop.f32.mrf.mxu0
  %v581 = vadd.f32 0.0, %v580
  %v582 = vpop.f32.mrf.mxu0
  %v583 = vpop.f32.mrf.mxu0
  %v584 = vadd.f32 0.0, %v583
  %v585 = vpop.f32.mrf.mxu0
  %586 = vdwg.mxu0
  %v587 = vadd.f32 %v437, %v557
  %v588 = vadd.f32 %v438, %v560
  %v589 = vadd.f32 %v439, %v565
  %v590 = vadd.f32 %v440, %v568
  %v591 = vadd.f32 %v441, %v573
  %v592 = vadd.f32 %v442, %v576
  %v593 = vadd.f32 %v443, %v581
  %v594 = vadd.f32 %v444, %v584
  %v595 = vld [vmem:[%s0 + $0xa] sm:$0xff]
  %v596 = vld [vmem:[%s0 + $0x12] sm:$0xff]
  %v597 = vld [vmem:[%s0 + $0x1a] sm:$0xff]
  %v598 = vld [vmem:[%s0 + $0x22] sm:$0xff]
  %v599 = vld [vmem:[%s0 + $0x2a] sm:$0xff]
  %v600 = vld [vmem:[%s0 + $0x32] sm:$0xff]
  %v601 = vld [vmem:[%s0 + $0x3a] sm:$0xff]
  %v602 = vld [vmem:[%s0 + $0x42] sm:$0xff]
  %v603 = vpack.c.bf16 %v596, %v595
  %v604 = vpack.c.bf16 %v598, %v597
  %v605 = vpack.c.bf16 %v600, %v599
  %v606 = vpack.c.bf16 %v602, %v601
  %s607 = scalar_lea.vmem %s1, 256
  %v608 = vld [vmem:[%s607] sm:$0xf]
  %v609 = vld [vmem:[%s607 + $0x4] sm:$0xf]
  %v610 = vld [vmem:[%s607 + $0x8] sm:$0xf]
  %v611 = vld [vmem:[%s607 + $0xc] sm:$0xf]
  %v612 = vld [vmem:[%s607 + $0x10] sm:$0xf]
  %v613 = vld [vmem:[%s607 + $0x14] sm:$0xf]
  %v614 = vld [vmem:[%s607 + $0x18] sm:$0xf]
  %v615 = vld [vmem:[%s607 + $0x1c] sm:$0xf]
  %v616 = vld [vmem:[%s607 + $0x20] sm:$0xf]
  %v617 = vld [vmem:[%s607 + $0x24] sm:$0xf]
  %v618 = vld [vmem:[%s607 + $0x28] sm:$0xf]
  %v619 = vld [vmem:[%s607 + $0x2c] sm:$0xf]
  %v620 = vld [vmem:[%s607 + $0x30] sm:$0xf]
  %v621 = vld [vmem:[%s607 + $0x34] sm:$0xf]
  %v622 = vld [vmem:[%s607 + $0x38] sm:$0xf]
  %v623 = vld [vmem:[%s607 + $0x3c] sm:$0xf]
  %v640 = vunpack.c.l.b16 %v608
  %v641 = vunpack.c.l.b16 %v609
  %v642 = vunpack.c.l.b16 %v610
  %v643 = vunpack.c.l.b16 %v611
  %v644 = vunpack.c.l.b16 %v612
  %v645 = vunpack.c.l.b16 %v613
  %v646 = vunpack.c.l.b16 %v614
  %v647 = vunpack.c.l.b16 %v615
  %v648 = vunpack.c.l.b16 %v616
  %v649 = vunpack.c.l.b16 %v617
  %v650 = vunpack.c.l.b16 %v618
  %v651 = vunpack.c.l.b16 %v619
  %v652 = vunpack.c.l.b16 %v620
  %v653 = vunpack.c.l.b16 %v621
  %v654 = vunpack.c.l.b16 %v622
  %v655 = vunpack.c.l.b16 %v623
  %v656 = vpack.c.b16 %v641, %v640
  %v657 = vpack.c.b16 %v643, %v642
  %v658 = vpack.c.b16 %v645, %v644
  %v659 = vpack.c.b16 %v647, %v646
  %v660 = vpack.c.b16 %v649, %v648
  %v661 = vpack.c.b16 %v651, %v650
  %v662 = vpack.c.b16 %v653, %v652
  %v663 = vpack.c.b16 %v655, %v654
  %672 = vmatprep.subr.bf16.mxu0 0
  %673 = vmatpush1.bf16.msra.mxu0 %v663
  %674 = vmatprep.subr.bf16.mxu0 0
  %675 = vmatpush1.bf16.msra.mxu0 %v662
  %676 = vmatprep.subr.bf16.mxu0 0
  %677 = vmatpush1.bf16.msra.mxu0 %v661
  %678 = vmatprep.subr.bf16.mxu0 0
  %679 = vmatpush1.bf16.msra.mxu0 %v660
  %680 = vmatprep.subr.bf16.mxu0 0
  %681 = vmatpush1.bf16.msra.mxu0 %v659
  %682 = vmatprep.subr.bf16.mxu0 0
  %683 = vmatpush1.bf16.msra.mxu0 %v658
  %684 = vmatprep.subr.bf16.mxu0 0
  %685 = vmatpush1.bf16.msra.mxu0 %v657
  %686 = vmatprep.subr.bf16.mxu0 0
  %687 = vmatpush1.bf16.msra.mxu0 %v656
  %688 = vmatprep.subr.bf16.mxu0 0
  %689 = vmatpush2.bf16.msra.mxu0 0
  %690 = vmatprep.subr.bf16.mxu0 0
  %691 = vmatpush2.bf16.msra.mxu0 0
  %692 = vmatprep.subr.bf16.mxu0 0
  %693 = vmatpush2.bf16.msra.mxu0 0
  %694 = vmatprep.subr.bf16.mxu0 0
  %695 = vmatpush2.bf16.msra.mxu0 0
  %696 = vmatprep.subr.bf16.mxu0 0
  %697 = vmatpush2.bf16.msra.mxu0 0
  %698 = vmatprep.subr.bf16.mxu0 0
  %699 = vmatpush2.bf16.msra.mxu0 0
  %700 = vmatprep.subr.bf16.mxu0 0
  %701 = vmatpush2.bf16.msra.mxu0 0
  %702 = vmatprep.subr.bf16.mxu0 0
  %703 = vmatpush2.bf16.msra.mxu0 0
  %704 = vmatprep.mubr.bf16.mxu0 0
  %705 = vmatmul.mubr.bf16.gmra.mxu0 %v603
  %v706 = vpop.f32.mrf.mxu0
  %v707 = vadd.f32 0.0, %v706
  %v708 = vpop.f32.mrf.mxu0
  %v709 = vpop.f32.mrf.mxu0
  %v710 = vadd.f32 0.0, %v709
  %v711 = vpop.f32.mrf.mxu0
  %712 = vmatprep.mubr.bf16.mxu0 0
  %713 = vmatmul.mubr.bf16.gmra.mxu0 %v604
  %v714 = vpop.f32.mrf.mxu0
  %v715 = vadd.f32 0.0, %v714
  %v716 = vpop.f32.mrf.mxu0
  %v717 = vpop.f32.mrf.mxu0
  %v718 = vadd.f32 0.0, %v717
  %v719 = vpop.f32.mrf.mxu0
  %720 = vmatprep.mubr.bf16.mxu0 0
  %721 = vmatmul.mubr.bf16.gmra.mxu0 %v605
  %v722 = vpop.f32.mrf.mxu0
  %v723 = vadd.f32 0.0, %v722
  %v724 = vpop.f32.mrf.mxu0
  %v725 = vpop.f32.mrf.mxu0
  %v726 = vadd.f32 0.0, %v725
  %v727 = vpop.f32.mrf.mxu0
  %728 = vmatprep.mubr.bf16.mxu0 0
  %729 = vmatmul.mubr.bf16.gmra.mxu0 %v606
  %v730 = vpop.f32.mrf.mxu0
  %v731 = vadd.f32 0.0, %v730
  %v732 = vpop.f32.mrf.mxu0
  %v733 = vpop.f32.mrf.mxu0
  %v734 = vadd.f32 0.0, %v733
  %v735 = vpop.f32.mrf.mxu0
  %736 = vdwg.mxu0
  %v737 = vadd.f32 %v587, %v707
  %v738 = vadd.f32 %v588, %v710
  %v739 = vadd.f32 %v589, %v715
  %v740 = vadd.f32 %v590, %v718
  %v741 = vadd.f32 %v591, %v723
  %v742 = vadd.f32 %v592, %v726
  %v743 = vadd.f32 %v593, %v731
  %v744 = vadd.f32 %v594, %v734
  %v745 = vld [vmem:[%s0 + $0xb] sm:$0xff]
  %v746 = vld [vmem:[%s0 + $0x13] sm:$0xff]
  %v747 = vld [vmem:[%s0 + $0x1b] sm:$0xff]
  %v748 = vld [vmem:[%s0 + $0x23] sm:$0xff]
  %v749 = vld [vmem:[%s0 + $0x2b] sm:$0xff]
  %v750 = vld [vmem:[%s0 + $0x33] sm:$0xff]
  %v751 = vld [vmem:[%s0 + $0x3b] sm:$0xff]
  %v752 = vld [vmem:[%s0 + $0x43] sm:$0xff]
  %v753 = vpack.c.bf16 %v746, %v745
  %v754 = vpack.c.bf16 %v748, %v747
  %v755 = vpack.c.bf16 %v750, %v749
  %v756 = vpack.c.bf16 %v752, %v751
  %s757 = scalar_lea.vmem %s1, 320
  %v758 = vld [vmem:[%s757] sm:$0xf]
  %v759 = vld [vmem:[%s757 + $0x4] sm:$0xf]
  %v760 = vld [vmem:[%s757 + $0x8] sm:$0xf]
  %v761 = vld [vmem:[%s757 + $0xc] sm:$0xf]
  %v762 = vld [vmem:[%s757 + $0x10] sm:$0xf]
  %v763 = vld [vmem:[%s757 + $0x14] sm:$0xf]
  %v764 = vld [vmem:[%s757 + $0x18] sm:$0xf]
  %v765 = vld [vmem:[%s757 + $0x1c] sm:$0xf]
  %v766 = vld [vmem:[%s757 + $0x20] sm:$0xf]
  %v767 = vld [vmem:[%s757 + $0x24] sm:$0xf]
  %v768 = vld [vmem:[%s757 + $0x28] sm:$0xf]
  %v769 = vld [vmem:[%s757 + $0x2c] sm:$0xf]
  %v770 = vld [vmem:[%s757 + $0x30] sm:$0xf]
  %v771 = vld [vmem:[%s757 + $0x34] sm:$0xf]
  %v772 = vld [vmem:[%s757 + $0x38] sm:$0xf]
  %v773 = vld [vmem:[%s757 + $0x3c] sm:$0xf]
  %v790 = vunpack.c.l.b16 %v758
  %v791 = vunpack.c.l.b16 %v759
  %v792 = vunpack.c.l.b16 %v760
  %v793 = vunpack.c.l.b16 %v761
  %v794 = vunpack.c.l.b16 %v762
  %v795 = vunpack.c.l.b16 %v763
  %v796 = vunpack.c.l.b16 %v764
  %v797 = vunpack.c.l.b16 %v765
  %v798 = vunpack.c.l.b16 %v766
  %v799 = vunpack.c.l.b16 %v767
  %v800 = vunpack.c.l.b16 %v768
  %v801 = vunpack.c.l.b16 %v769
  %v802 = vunpack.c.l.b16 %v770
  %v803 = vunpack.c.l.b16 %v771
  %v804 = vunpack.c.l.b16 %v772
  %v805 = vunpack.c.l.b16 %v773
  %v806 = vpack.c.b16 %v791, %v790
  %v807 = vpack.c.b16 %v793, %v792
  %v808 = vpack.c.b16 %v795, %v794
  %v809 = vpack.c.b16 %v797, %v796
  %v810 = vpack.c.b16 %v799, %v798
  %v811 = vpack.c.b16 %v801, %v800
  %v812 = vpack.c.b16 %v803, %v802
  %v813 = vpack.c.b16 %v805, %v804
  %822 = vmatprep.subr.bf16.mxu0 0
  %823 = vmatpush1.bf16.msra.mxu0 %v813
  %824 = vmatprep.subr.bf16.mxu0 0
  %825 = vmatpush1.bf16.msra.mxu0 %v812
  %826 = vmatprep.subr.bf16.mxu0 0
  %827 = vmatpush1.bf16.msra.mxu0 %v811
  %828 = vmatprep.subr.bf16.mxu0 0
  %829 = vmatpush1.bf16.msra.mxu0 %v810
  %830 = vmatprep.subr.bf16.mxu0 0
  %831 = vmatpush1.bf16.msra.mxu0 %v809
  %832 = vmatprep.subr.bf16.mxu0 0
  %833 = vmatpush1.bf16.msra.mxu0 %v808
  %834 = vmatprep.subr.bf16.mxu0 0
  %835 = vmatpush1.bf16.msra.mxu0 %v807
  %836 = vmatprep.subr.bf16.mxu0 0
  %837 = vmatpush1.bf16.msra.mxu0 %v806
  %838 = vmatprep.subr.bf16.mxu0 0
  %839 = vmatpush2.bf16.msra.mxu0 0
  %840 = vmatprep.subr.bf16.mxu0 0
  %841 = vmatpush2.bf16.msra.mxu0 0
  %842 = vmatprep.subr.bf16.mxu0 0
  %843 = vmatpush2.bf16.msra.mxu0 0
  %844 = vmatprep.subr.bf16.mxu0 0
  %845 = vmatpush2.bf16.msra.mxu0 0
  %846 = vmatprep.subr.bf16.mxu0 0
  %847 = vmatpush2.bf16.msra.mxu0 0
  %848 = vmatprep.subr.bf16.mxu0 0
  %849 = vmatpush2.bf16.msra.mxu0 0
  %850 = vmatprep.subr.bf16.mxu0 0
  %851 = vmatpush2.bf16.msra.mxu0 0
  %852 = vmatprep.subr.bf16.mxu0 0
  %853 = vmatpush2.bf16.msra.mxu0 0
  %854 = vmatprep.mubr.bf16.mxu0 0
  %855 = vmatmul.mubr.bf16.gmra.mxu0 %v753
  %v856 = vpop.f32.mrf.mxu0
  %v857 = vadd.f32 0.0, %v856
  %v858 = vpop.f32.mrf.mxu0
  %v859 = vpop.f32.mrf.mxu0
  %v860 = vadd.f32 0.0, %v859
  %v861 = vpop.f32.mrf.mxu0
  %862 = vmatprep.mubr.bf16.mxu0 0
  %863 = vmatmul.mubr.bf16.gmra.mxu0 %v754
  %v864 = vpop.f32.mrf.mxu0
  %v865 = vadd.f32 0.0, %v864
  %v866 = vpop.f32.mrf.mxu0
  %v867 = vpop.f32.mrf.mxu0
  %v868 = vadd.f32 0.0, %v867
  %v869 = vpop.f32.mrf.mxu0
  %870 = vmatprep.mubr.bf16.mxu0 0
  %871 = vmatmul.mubr.bf16.gmra.mxu0 %v755
  %v872 = vpop.f32.mrf.mxu0
  %v873 = vadd.f32 0.0, %v872
  %v874 = vpop.f32.mrf.mxu0
  %v875 = vpop.f32.mrf.mxu0
  %v876 = vadd.f32 0.0, %v875
  %v877 = vpop.f32.mrf.mxu0
  %878 = vmatprep.mubr.bf16.mxu0 0
  %879 = vmatmul.mubr.bf16.gmra.mxu0 %v756
  %v880 = vpop.f32.mrf.mxu0
  %v881 = vadd.f32 0.0, %v880
  %v882 = vpop.f32.mrf.mxu0
  %v883 = vpop.f32.mrf.mxu0
  %v884 = vadd.f32 0.0, %v883
  %v885 = vpop.f32.mrf.mxu0
  %886 = vdwg.mxu0
  %v887 = vadd.f32 %v737, %v857
  %v888 = vadd.f32 %v738, %v860
  %v889 = vadd.f32 %v739, %v865
  %v890 = vadd.f32 %v740, %v868
  %v891 = vadd.f32 %v741, %v873
  %v892 = vadd.f32 %v742, %v876
  %v893 = vadd.f32 %v743, %v881
  %v894 = vadd.f32 %v744, %v884
  %v895 = vld [vmem:[%s0 + $0x12] sm:$0xff]
  %v896 = vld [vmem:[%s0 + $0x1a] sm:$0xff]
  %v897 = vld [vmem:[%s0 + $0x22] sm:$0xff]
  %v898 = vld [vmem:[%s0 + $0x2a] sm:$0xff]
  %v899 = vld [vmem:[%s0 + $0x32] sm:$0xff]
  %v900 = vld [vmem:[%s0 + $0x3a] sm:$0xff]
  %v901 = vld [vmem:[%s0 + $0x42] sm:$0xff]
  %v902 = vld [vmem:[%s0 + $0x4a] sm:$0xff]
  %v903 = vpack.c.bf16 %v896, %v895
  %v904 = vpack.c.bf16 %v898, %v897
  %v905 = vpack.c.bf16 %v900, %v899
  %v906 = vpack.c.bf16 %v902, %v901
  %s907 = scalar_lea.vmem %s1, 384
  %v908 = vld [vmem:[%s907] sm:$0xf]
  %v909 = vld [vmem:[%s907 + $0x4] sm:$0xf]
  %v910 = vld [vmem:[%s907 + $0x8] sm:$0xf]
  %v911 = vld [vmem:[%s907 + $0xc] sm:$0xf]
  %v912 = vld [vmem:[%s907 + $0x10] sm:$0xf]
  %v913 = vld [vmem:[%s907 + $0x14] sm:$0xf]
  %v914 = vld [vmem:[%s907 + $0x18] sm:$0xf]
  %v915 = vld [vmem:[%s907 + $0x1c] sm:$0xf]
  %v916 = vld [vmem:[%s907 + $0x20] sm:$0xf]
  %v917 = vld [vmem:[%s907 + $0x24] sm:$0xf]
  %v918 = vld [vmem:[%s907 + $0x28] sm:$0xf]
  %v919 = vld [vmem:[%s907 + $0x2c] sm:$0xf]
  %v920 = vld [vmem:[%s907 + $0x30] sm:$0xf]
  %v921 = vld [vmem:[%s907 + $0x34] sm:$0xf]
  %v922 = vld [vmem:[%s907 + $0x38] sm:$0xf]
  %v923 = vld [vmem:[%s907 + $0x3c] sm:$0xf]
  %v940 = vunpack.c.l.b16 %v908
  %v941 = vunpack.c.l.b16 %v909
  %v942 = vunpack.c.l.b16 %v910
  %v943 = vunpack.c.l.b16 %v911
  %v944 = vunpack.c.l.b16 %v912
  %v945 = vunpack.c.l.b16 %v913
  %v946 = vunpack.c.l.b16 %v914
  %v947 = vunpack.c.l.b16 %v915
  %v948 = vunpack.c.l.b16 %v916
  %v949 = vunpack.c.l.b16 %v917
  %v950 = vunpack.c.l.b16 %v918
  %v951 = vunpack.c.l.b16 %v919
  %v952 = vunpack.c.l.b16 %v920
  %v953 = vunpack.c.l.b16 %v921
  %v954 = vunpack.c.l.b16 %v922
  %v955 = vunpack.c.l.b16 %v923
  %v956 = vpack.c.b16 %v941, %v940
  %v957 = vpack.c.b16 %v943, %v942
  %v958 = vpack.c.b16 %v945, %v944
  %v959 = vpack.c.b16 %v947, %v946
  %v960 = vpack.c.b16 %v949, %v948
  %v961 = vpack.c.b16 %v951, %v950
  %v962 = vpack.c.b16 %v953, %v952
  %v963 = vpack.c.b16 %v955, %v954
  %972 = vmatprep.subr.bf16.mxu0 0
  %973 = vmatpush1.bf16.msra.mxu0 %v963
  %974 = vmatprep.subr.bf16.mxu0 0
  %975 = vmatpush1.bf16.msra.mxu0 %v962
  %976 = vmatprep.subr.bf16.mxu0 0
  %977 = vmatpush1.bf16.msra.mxu0 %v961
  %978 = vmatprep.subr.bf16.mxu0 0
  %979 = vmatpush1.bf16.msra.mxu0 %v960
  %980 = vmatprep.subr.bf16.mxu0 0
  %981 = vmatpush1.bf16.msra.mxu0 %v959
  %982 = vmatprep.subr.bf16.mxu0 0
  %983 = vmatpush1.bf16.msra.mxu0 %v958
  %984 = vmatprep.subr.bf16.mxu0 0
  %985 = vmatpush1.bf16.msra.mxu0 %v957
  %986 = vmatprep.subr.bf16.mxu0 0
  %987 = vmatpush1.bf16.msra.mxu0 %v956
  %988 = vmatprep.subr.bf16.mxu0 0
  %989 = vmatpush2.bf16.msra.mxu0 0
  %990 = vmatprep.subr.bf16.mxu0 0
  %991 = vmatpush2.bf16.msra.mxu0 0
  %992 = vmatprep.subr.bf16.mxu0 0
  %993 = vmatpush2.bf16.msra.mxu0 0
  %994 = vmatprep.subr.bf16.mxu0 0
  %995 = vmatpush2.bf16.msra.mxu0 0
  %996 = vmatprep.subr.bf16.mxu0 0
  %997 = vmatpush2.bf16.msra.mxu0 0
  %998 = vmatprep.subr.bf16.mxu0 0
  %999 = vmatpush2.bf16.msra.mxu0 0
  %1000 = vmatprep.subr.bf16.mxu0 0
  %1001 = vmatpush2.bf16.msra.mxu0 0
  %1002 = vmatprep.subr.bf16.mxu0 0
  %1003 = vmatpush2.bf16.msra.mxu0 0
  %1004 = vmatprep.mubr.bf16.mxu0 0
  %1005 = vmatmul.mubr.bf16.gmra.mxu0 %v903
  %v1006 = vpop.f32.mrf.mxu0
  %v1007 = vadd.f32 0.0, %v1006
  %v1008 = vpop.f32.mrf.mxu0
  %v1009 = vpop.f32.mrf.mxu0
  %v1010 = vadd.f32 0.0, %v1009
  %v1011 = vpop.f32.mrf.mxu0
  %1012 = vmatprep.mubr.bf16.mxu0 0
  %1013 = vmatmul.mubr.bf16.gmra.mxu0 %v904
  %v1014 = vpop.f32.mrf.mxu0
  %v1015 = vadd.f32 0.0, %v1014
  %v1016 = vpop.f32.mrf.mxu0
  %v1017 = vpop.f32.mrf.mxu0
  %v1018 = vadd.f32 0.0, %v1017
  %v1019 = vpop.f32.mrf.mxu0
  %1020 = vmatprep.mubr.bf16.mxu0 0
  %1021 = vmatmul.mubr.bf16.gmra.mxu0 %v905
  %v1022 = vpop.f32.mrf.mxu0
  %v1023 = vadd.f32 0.0, %v1022
  %v1024 = vpop.f32.mrf.mxu0
  %v1025 = vpop.f32.mrf.mxu0
  %v1026 = vadd.f32 0.0, %v1025
  %v1027 = vpop.f32.mrf.mxu0
  %1028 = vmatprep.mubr.bf16.mxu0 0
  %1029 = vmatmul.mubr.bf16.gmra.mxu0 %v906
  %v1030 = vpop.f32.mrf.mxu0
  %v1031 = vadd.f32 0.0, %v1030
  %v1032 = vpop.f32.mrf.mxu0
  %v1033 = vpop.f32.mrf.mxu0
  %v1034 = vadd.f32 0.0, %v1033
  %v1035 = vpop.f32.mrf.mxu0
  %1036 = vdwg.mxu0
  %v1037 = vadd.f32 %v887, %v1007
  %v1038 = vadd.f32 %v888, %v1010
  %v1039 = vadd.f32 %v889, %v1015
  %v1040 = vadd.f32 %v890, %v1018
  %v1041 = vadd.f32 %v891, %v1023
  %v1042 = vadd.f32 %v892, %v1026
  %v1043 = vadd.f32 %v893, %v1031
  %v1044 = vadd.f32 %v894, %v1034
  %v1045 = vld [vmem:[%s0 + $0x13] sm:$0xff]
  %v1046 = vld [vmem:[%s0 + $0x1b] sm:$0xff]
  %v1047 = vld [vmem:[%s0 + $0x23] sm:$0xff]
  %v1048 = vld [vmem:[%s0 + $0x2b] sm:$0xff]
  %v1049 = vld [vmem:[%s0 + $0x33] sm:$0xff]
  %v1050 = vld [vmem:[%s0 + $0x3b] sm:$0xff]
  %v1051 = vld [vmem:[%s0 + $0x43] sm:$0xff]
  %v1052 = vld [vmem:[%s0 + $0x4b] sm:$0xff]
  %v1053 = vpack.c.bf16 %v1046, %v1045
  %v1054 = vpack.c.bf16 %v1048, %v1047
  %v1055 = vpack.c.bf16 %v1050, %v1049
  %v1056 = vpack.c.bf16 %v1052, %v1051
  %s1057 = scalar_lea.vmem %s1, 448
  %v1058 = vld [vmem:[%s1057] sm:$0xf]
  %v1059 = vld [vmem:[%s1057 + $0x4] sm:$0xf]
  %v1060 = vld [vmem:[%s1057 + $0x8] sm:$0xf]
  %v1061 = vld [vmem:[%s1057 + $0xc] sm:$0xf]
  %v1062 = vld [vmem:[%s1057 + $0x10] sm:$0xf]
  %v1063 = vld [vmem:[%s1057 + $0x14] sm:$0xf]
  %v1064 = vld [vmem:[%s1057 + $0x18] sm:$0xf]
  %v1065 = vld [vmem:[%s1057 + $0x1c] sm:$0xf]
  %v1066 = vld [vmem:[%s1057 + $0x20] sm:$0xf]
  %v1067 = vld [vmem:[%s1057 + $0x24] sm:$0xf]
  %v1068 = vld [vmem:[%s1057 + $0x28] sm:$0xf]
  %v1069 = vld [vmem:[%s1057 + $0x2c] sm:$0xf]
  %v1070 = vld [vmem:[%s1057 + $0x30] sm:$0xf]
  %v1071 = vld [vmem:[%s1057 + $0x34] sm:$0xf]
  %v1072 = vld [vmem:[%s1057 + $0x38] sm:$0xf]
  %v1073 = vld [vmem:[%s1057 + $0x3c] sm:$0xf]
  %v1090 = vunpack.c.l.b16 %v1058
  %v1091 = vunpack.c.l.b16 %v1059
  %v1092 = vunpack.c.l.b16 %v1060
  %v1093 = vunpack.c.l.b16 %v1061
  %v1094 = vunpack.c.l.b16 %v1062
  %v1095 = vunpack.c.l.b16 %v1063
  %v1096 = vunpack.c.l.b16 %v1064
  %v1097 = vunpack.c.l.b16 %v1065
  %v1098 = vunpack.c.l.b16 %v1066
  %v1099 = vunpack.c.l.b16 %v1067
  %v1100 = vunpack.c.l.b16 %v1068
  %v1101 = vunpack.c.l.b16 %v1069
  %v1102 = vunpack.c.l.b16 %v1070
  %v1103 = vunpack.c.l.b16 %v1071
  %v1104 = vunpack.c.l.b16 %v1072
  %v1105 = vunpack.c.l.b16 %v1073
  %v1106 = vpack.c.b16 %v1091, %v1090
  %v1107 = vpack.c.b16 %v1093, %v1092
  %v1108 = vpack.c.b16 %v1095, %v1094
  %v1109 = vpack.c.b16 %v1097, %v1096
  %v1110 = vpack.c.b16 %v1099, %v1098
  %v1111 = vpack.c.b16 %v1101, %v1100
  %v1112 = vpack.c.b16 %v1103, %v1102
  %v1113 = vpack.c.b16 %v1105, %v1104
  %1122 = vmatprep.subr.bf16.mxu0 0
  %1123 = vmatpush1.bf16.msra.mxu0 %v1113
  %1124 = vmatprep.subr.bf16.mxu0 0
  %1125 = vmatpush1.bf16.msra.mxu0 %v1112
  %1126 = vmatprep.subr.bf16.mxu0 0
  %1127 = vmatpush1.bf16.msra.mxu0 %v1111
  %1128 = vmatprep.subr.bf16.mxu0 0
  %1129 = vmatpush1.bf16.msra.mxu0 %v1110
  %1130 = vmatprep.subr.bf16.mxu0 0
  %1131 = vmatpush1.bf16.msra.mxu0 %v1109
  %1132 = vmatprep.subr.bf16.mxu0 0
  %1133 = vmatpush1.bf16.msra.mxu0 %v1108
  %1134 = vmatprep.subr.bf16.mxu0 0
  %1135 = vmatpush1.bf16.msra.mxu0 %v1107
  %1136 = vmatprep.subr.bf16.mxu0 0
  %1137 = vmatpush1.bf16.msra.mxu0 %v1106
  %1138 = vmatprep.subr.bf16.mxu0 0
  %1139 = vmatpush2.bf16.msra.mxu0 0
  %1140 = vmatprep.subr.bf16.mxu0 0
  %1141 = vmatpush2.bf16.msra.mxu0 0
  %1142 = vmatprep.subr.bf16.mxu0 0
  %1143 = vmatpush2.bf16.msra.mxu0 0
  %1144 = vmatprep.subr.bf16.mxu0 0
  %1145 = vmatpush2.bf16.msra.mxu0 0
  %1146 = vmatprep.subr.bf16.mxu0 0
  %1147 = vmatpush2.bf16.msra.mxu0 0
  %1148 = vmatprep.subr.bf16.mxu0 0
  %1149 = vmatpush2.bf16.msra.mxu0 0
  %1150 = vmatprep.subr.bf16.mxu0 0
  %1151 = vmatpush2.bf16.msra.mxu0 0
  %1152 = vmatprep.subr.bf16.mxu0 0
  %1153 = vmatpush2.bf16.msra.mxu0 0
  %1154 = vmatprep.mubr.bf16.mxu0 0
  %1155 = vmatmul.mubr.bf16.gmra.mxu0 %v1053
  %v1156 = vpop.f32.mrf.mxu0
  %v1157 = vadd.f32 0.0, %v1156
  %v1158 = vpop.f32.mrf.mxu0
  %v1159 = vpop.f32.mrf.mxu0
  %v1160 = vadd.f32 0.0, %v1159
  %v1161 = vpop.f32.mrf.mxu0
  %1162 = vmatprep.mubr.bf16.mxu0 0
  %1163 = vmatmul.mubr.bf16.gmra.mxu0 %v1054
  %v1164 = vpop.f32.mrf.mxu0
  %v1165 = vadd.f32 0.0, %v1164
  %v1166 = vpop.f32.mrf.mxu0
  %v1167 = vpop.f32.mrf.mxu0
  %v1168 = vadd.f32 0.0, %v1167
  %v1169 = vpop.f32.mrf.mxu0
  %1170 = vmatprep.mubr.bf16.mxu0 0
  %1171 = vmatmul.mubr.bf16.gmra.mxu0 %v1055
  %v1172 = vpop.f32.mrf.mxu0
  %v1173 = vadd.f32 0.0, %v1172
  %v1174 = vpop.f32.mrf.mxu0
  %v1175 = vpop.f32.mrf.mxu0
  %v1176 = vadd.f32 0.0, %v1175
  %v1177 = vpop.f32.mrf.mxu0
  %1178 = vmatprep.mubr.bf16.mxu0 0
  %1179 = vmatmul.mubr.bf16.gmra.mxu0 %v1056
  %v1180 = vpop.f32.mrf.mxu0
  %v1181 = vadd.f32 0.0, %v1180
  %v1182 = vpop.f32.mrf.mxu0
  %v1183 = vpop.f32.mrf.mxu0
  %v1184 = vadd.f32 0.0, %v1183
  %v1185 = vpop.f32.mrf.mxu0
  %1186 = vdwg.mxu0
  %v1187 = vadd.f32 %v1037, %v1157
  %v1188 = vadd.f32 %v1038, %v1160
  %v1189 = vadd.f32 %v1039, %v1165
  %v1190 = vadd.f32 %v1040, %v1168
  %v1191 = vadd.f32 %v1041, %v1173
  %v1192 = vadd.f32 %v1042, %v1176
  %v1193 = vadd.f32 %v1043, %v1181
  %v1194 = vadd.f32 %v1044, %v1184
  %v1195 = vld [vmem:[%s0 + $0x14] sm:$0xff]
  %v1196 = vld [vmem:[%s0 + $0x1c] sm:$0xff]
  %v1197 = vld [vmem:[%s0 + $0x24] sm:$0xff]
  %v1198 = vld [vmem:[%s0 + $0x2c] sm:$0xff]
  %v1199 = vld [vmem:[%s0 + $0x34] sm:$0xff]
  %v1200 = vld [vmem:[%s0 + $0x3c] sm:$0xff]
  %v1201 = vld [vmem:[%s0 + $0x44] sm:$0xff]
  %v1202 = vld [vmem:[%s0 + $0x4c] sm:$0xff]
  %v1203 = vpack.c.bf16 %v1196, %v1195
  %v1204 = vpack.c.bf16 %v1198, %v1197
  %v1205 = vpack.c.bf16 %v1200, %v1199
  %v1206 = vpack.c.bf16 %v1202, %v1201
  %s1207 = scalar_lea.vmem %s1, 512
  %v1208 = vld [vmem:[%s1207] sm:$0xf]
  %v1209 = vld [vmem:[%s1207 + $0x4] sm:$0xf]
  %v1210 = vld [vmem:[%s1207 + $0x8] sm:$0xf]
  %v1211 = vld [vmem:[%s1207 + $0xc] sm:$0xf]
  %v1212 = vld [vmem:[%s1207 + $0x10] sm:$0xf]
  %v1213 = vld [vmem:[%s1207 + $0x14] sm:$0xf]
  %v1214 = vld [vmem:[%s1207 + $0x18] sm:$0xf]
  %v1215 = vld [vmem:[%s1207 + $0x1c] sm:$0xf]
  %v1216 = vld [vmem:[%s1207 + $0x20] sm:$0xf]
  %v1217 = vld [vmem:[%s1207 + $0x24] sm:$0xf]
  %v1218 = vld [vmem:[%s1207 + $0x28] sm:$0xf]
  %v1219 = vld [vmem:[%s1207 + $0x2c] sm:$0xf]
  %v1220 = vld [vmem:[%s1207 + $0x30] sm:$0xf]
  %v1221 = vld [vmem:[%s1207 + $0x34] sm:$0xf]
  %v1222 = vld [vmem:[%s1207 + $0x38] sm:$0xf]
  %v1223 = vld [vmem:[%s1207 + $0x3c] sm:$0xf]
  %v1240 = vunpack.c.l.b16 %v1208
  %v1241 = vunpack.c.l.b16 %v1209
  %v1242 = vunpack.c.l.b16 %v1210
  %v1243 = vunpack.c.l.b16 %v1211
  %v1244 = vunpack.c.l.b16 %v1212
  %v1245 = vunpack.c.l.b16 %v1213
  %v1246 = vunpack.c.l.b16 %v1214
  %v1247 = vunpack.c.l.b16 %v1215
  %v1248 = vunpack.c.l.b16 %v1216
  %v1249 = vunpack.c.l.b16 %v1217
  %v1250 = vunpack.c.l.b16 %v1218
  %v1251 = vunpack.c.l.b16 %v1219
  %v1252 = vunpack.c.l.b16 %v1220
  %v1253 = vunpack.c.l.b16 %v1221
  %v1254 = vunpack.c.l.b16 %v1222
  %v1255 = vunpack.c.l.b16 %v1223
  %v1256 = vpack.c.b16 %v1241, %v1240
  %v1257 = vpack.c.b16 %v1243, %v1242
  %v1258 = vpack.c.b16 %v1245, %v1244
  %v1259 = vpack.c.b16 %v1247, %v1246
  %v1260 = vpack.c.b16 %v1249, %v1248
  %v1261 = vpack.c.b16 %v1251, %v1250
  %v1262 = vpack.c.b16 %v1253, %v1252
  %v1263 = vpack.c.b16 %v1255, %v1254
  %1272 = vmatprep.subr.bf16.mxu0 0
  %1273 = vmatpush1.bf16.msra.mxu0 %v1263
  %1274 = vmatprep.subr.bf16.mxu0 0
  %1275 = vmatpush1.bf16.msra.mxu0 %v1262
  %1276 = vmatprep.subr.bf16.mxu0 0
  %1277 = vmatpush1.bf16.msra.mxu0 %v1261
  %1278 = vmatprep.subr.bf16.mxu0 0
  %1279 = vmatpush1.bf16.msra.mxu0 %v1260
  %1280 = vmatprep.subr.bf16.mxu0 0
  %1281 = vmatpush1.bf16.msra.mxu0 %v1259
  %1282 = vmatprep.subr.bf16.mxu0 0
  %1283 = vmatpush1.bf16.msra.mxu0 %v1258
  %1284 = vmatprep.subr.bf16.mxu0 0
  %1285 = vmatpush1.bf16.msra.mxu0 %v1257
  %1286 = vmatprep.subr.bf16.mxu0 0
  %1287 = vmatpush1.bf16.msra.mxu0 %v1256
  %1288 = vmatprep.subr.bf16.mxu0 0
  %1289 = vmatpush2.bf16.msra.mxu0 0
  %1290 = vmatprep.subr.bf16.mxu0 0
  %1291 = vmatpush2.bf16.msra.mxu0 0
  %1292 = vmatprep.subr.bf16.mxu0 0
  %1293 = vmatpush2.bf16.msra.mxu0 0
  %1294 = vmatprep.subr.bf16.mxu0 0
  %1295 = vmatpush2.bf16.msra.mxu0 0
  %1296 = vmatprep.subr.bf16.mxu0 0
  %1297 = vmatpush2.bf16.msra.mxu0 0
  %1298 = vmatprep.subr.bf16.mxu0 0
  %1299 = vmatpush2.bf16.msra.mxu0 0
  %1300 = vmatprep.subr.bf16.mxu0 0
  %1301 = vmatpush2.bf16.msra.mxu0 0
  %1302 = vmatprep.subr.bf16.mxu0 0
  %1303 = vmatpush2.bf16.msra.mxu0 0
  %1304 = vmatprep.mubr.bf16.mxu0 0
  %1305 = vmatmul.mubr.bf16.gmra.mxu0 %v1203
  %v1306 = vpop.f32.mrf.mxu0
  %v1307 = vadd.f32 0.0, %v1306
  %v1308 = vpop.f32.mrf.mxu0
  %v1309 = vpop.f32.mrf.mxu0
  %v1310 = vadd.f32 0.0, %v1309
  %v1311 = vpop.f32.mrf.mxu0
  %1312 = vmatprep.mubr.bf16.mxu0 0
  %1313 = vmatmul.mubr.bf16.gmra.mxu0 %v1204
  %v1314 = vpop.f32.mrf.mxu0
  %v1315 = vadd.f32 0.0, %v1314
  %v1316 = vpop.f32.mrf.mxu0
  %v1317 = vpop.f32.mrf.mxu0
  %v1318 = vadd.f32 0.0, %v1317
  %v1319 = vpop.f32.mrf.mxu0
  %1320 = vmatprep.mubr.bf16.mxu0 0
  %1321 = vmatmul.mubr.bf16.gmra.mxu0 %v1205
  %v1322 = vpop.f32.mrf.mxu0
  %v1323 = vadd.f32 0.0, %v1322
  %v1324 = vpop.f32.mrf.mxu0
  %v1325 = vpop.f32.mrf.mxu0
  %v1326 = vadd.f32 0.0, %v1325
  %v1327 = vpop.f32.mrf.mxu0
  %1328 = vmatprep.mubr.bf16.mxu0 0
  %1329 = vmatmul.mubr.bf16.gmra.mxu0 %v1206
  %v1330 = vpop.f32.mrf.mxu0
  %v1331 = vadd.f32 0.0, %v1330
  %v1332 = vpop.f32.mrf.mxu0
  %v1333 = vpop.f32.mrf.mxu0
  %v1334 = vadd.f32 0.0, %v1333
  %v1335 = vpop.f32.mrf.mxu0
  %1336 = vdwg.mxu0
  %v1337 = vadd.f32 %v1187, %v1307
  %v1338 = vadd.f32 %v1188, %v1310
  %v1339 = vadd.f32 %v1189, %v1315
  %v1340 = vadd.f32 %v1190, %v1318
  %v1341 = vadd.f32 %v1191, %v1323
  %v1342 = vadd.f32 %v1192, %v1326
  %v1343 = vadd.f32 %v1193, %v1331
  %v1344 = vadd.f32 %v1194, %v1334
  %vm1345 = vcmask 261120
  %1346 = vst.msk [vmem:[%s2] sm:$0xff] %vm1345, %v1337
  %1347 = vst.msk [vmem:[%s2 + $0x8] sm:$0xff] %vm1345, %v1338
  %1348 = vst.msk [vmem:[%s2 + $0x10] sm:$0xff] %vm1345, %v1339
  %1349 = vst.msk [vmem:[%s2 + $0x18] sm:$0xff] %vm1345, %v1340
  %1350 = vst.msk [vmem:[%s2 + $0x20] sm:$0xff] %vm1345, %v1341
  %1351 = vst.msk [vmem:[%s2 + $0x28] sm:$0xff] %vm1345, %v1342
  %1352 = vst.msk [vmem:[%s2 + $0x30] sm:$0xff] %vm1345, %v1343
  %1353 = vst.msk [vmem:[%s2 + $0x38] sm:$0xff] %vm1345, %v1344
  // Predicated region
  $region10: #{conv2d_3x3_pallas.1} parent=0 // pred_check
    _
  $region11: #{conv2d_3x3_pallas.1} parent=0 // pred_check_branch
    %1355 = sbr.rel (0) target = $region13
  $region12: #{conv2d_3x3_pallas.1} parent=0 // pred_region
    _
  $region13: #{conv2d_3x3_pallas.1} parent=0 // pred_fallthru
    _
  // Predicated region
  $region14: #{conv2d_3x3_pallas.1} parent=0 // pred_check
    _
  $region15: #{conv2d_3x3_pallas.1} parent=0 // pred_check_branch
    %1357 = sbr.rel (0) target = $region17
  $region16: #{conv2d_3x3_pallas.1} parent=0 // pred_region
    _
  $region17: #{conv2d_3x3_pallas.1} parent=0 // pred_fallthru
    _

</llo_original>
